<compile_context>
chip_gen: v7x
topology: tpu7x:2x2x1
jax: 0.10.0
libtpu: 0.0.40
codegen_flags: <defaults>
</compile_context>

<pallas_src>
import functools

import jax
import jax.numpy as jnp
from jax import lax
from jax.experimental import pallas as pl
from jax.experimental.pallas import tpu as pltpu


# ---------------------------------------------------------------------------
# VMEM / tiling policy (one conservative setting valid on v5e / v6e / v7x)
# ---------------------------------------------------------------------------
_VMEM_LIMIT_BYTES = 44 * 1024 * 1024      # raised scoped-VMEM ceiling (< 64 MiB v7x physical)
_TILE_BUDGET_BYTES = 28 * 1024 * 1024     # budget for the double-buffered pipeline tiles
_W_RESIDENT_MAX_BYTES = 16 * 1024 * 1024  # above this, tile D_out so W blocks stay small


def _round_up(x, m):
    return ((x + m - 1) // m) * m


def _pick_tn(d_in, d_out_p):
    """Output-column tile: keep the double-buffered bf16 W block under the
    residency cap; use the full (padded) D_out when it already fits."""
    if 2 * 2 * d_in * d_out_p <= _W_RESIDENT_MAX_BYTES:
        return d_out_p
    max_tn = max(128, _W_RESIDENT_MAX_BYTES // (2 * 2 * d_in))
    best = 128
    m = d_out_p // 128
    for k in range(1, m + 1):                 # largest 128-multiple divisor <= max_tn
        if m % k == 0 and 128 * k <= max_tn:
            best = 128 * k
    return best


def _pick_batch_tiling(batch, d_in, tn):
    """Pick (b_pad, tb): batch tile as large as the VMEM budget allows
    (targets >= 512 rows when the batch permits) while guaranteeing >= 2 batch
    tiles when batch >= 16 so both v7x TensorCores get sharded work."""
    b8 = _round_up(max(batch, 1), 8)
    # double-buffered fixed tiles: W (bf16) + bias (f32) + (8, tn) psum out
    fixed = 2 * (2 * d_in * tn) + 2 * (4 * tn) + 2 * (8 * tn * 4)
    # per-batch-row, double-buffered: x row (f32) + out-or-target row (f32)
    per_row = 2 * (4 * d_in) + 2 * (4 * tn)
    budget = max(_TILE_BUDGET_BYTES - fixed, 64 * 1024)
    tb = max(8, min(budget // per_row, b8, 2048))
    tb = (tb // 8) * 8
    if tb >= 512:
        tb = (tb // 256) * 256                # feed the 256-wide MXU on v6e/v7x
    if b8 >= 16:                              # >= 2 batch tiles for the 2 v7x TCs
        tb = min(tb, (b8 // 2 // 8) * 8)
    tb = max(8, tb)
    n_tiles = -(-b8 // tb)
    tb = _round_up(-(-b8 // n_tiles), 8)      # rebalance tiles: minimal row padding
    return tb * n_tiles, tb


def _pad2d(a, rows, cols, dtype=None):
    pr, pc = rows - a.shape[0], cols - a.shape[1]
    out = a if (pr == 0 and pc == 0) else jnp.pad(a, ((0, pr), (0, pc)))
    return out.astype(dtype) if dtype is not None else out


# ---------------------------------------------------------------------------
# Pallas kernels
# ---------------------------------------------------------------------------
def _linear_kernel(x_ref, w_ref, b_ref, o_ref):
    """pred = x @ W + b.  x arrives f32 (no wrapper-side pad/cast round trip);
    the bf16 cast for the MXU happens in-kernel, accumulation is f32."""
    x = x_ref[...].astype(jnp.bfloat16)
    acc = jnp.dot(x, w_ref[...], preferred_element_type=jnp.float32)
    o_ref[...] = (acc + b_ref[...]).astype(o_ref.dtype)


def _linear_mse_partial_kernel(x_ref, w_ref, b_ref, t_ref, psum_ref, *,
                               tb, rows_in_last_tile):
    """Fused pred = x @ W + b ; lane-dense per-tile partial sums of (pred-t)^2.

    Padded D_out columns need no mask: padded W/bias/target columns are all
    zero, so their diff is exactly 0.  Padded batch rows (pred == bias) DO
    need masking, but only the last batch tile can contain them, so the row
    mask is gated behind pl.when on that tile only.
    """
    x = x_ref[...].astype(jnp.bfloat16)
    pred = jnp.dot(x, w_ref[...], preferred_element_type=jnp.float32) + b_ref[...]
    diff = pred - t_ref[...]
    sq = diff * diff
    tn = sq.shape[1]

    def _psum(v):                        # batch-only partial reduce, lanes stay dense
        return jnp.sum(v.reshape(tb // 8, 8, tn), axis=0)

    if rows_in_last_tile is None:        # static: no padded rows exist at all
        psum_ref[...] = _psum(sq)
    else:
        is_last = pl.program_id(0) == pl.num_programs(0) - 1

        @pl.when(jnp.logical_not(is_last))
        def _():
            psum_ref[...] = _psum(sq)

        @pl.when(is_last)
        def _():
            row = lax.broadcasted_iota(jnp.int32, sq.shape, 0)
            psum_ref[...] = _psum(
                jnp.where(row < rows_in_last_tile, sq, jnp.float32(0.0)))


# ---------------------------------------------------------------------------
# pallas_call wrappers
# ---------------------------------------------------------------------------
def linear_forward_padded(x_pad, w_t_p, b_p, *, tb, tn):
    b_rows, d_in = x_pad.shape
    d_out_p = w_t_p.shape[1]
    n_b, n_n = b_rows // tb, d_out_p // tn

    flops = 2 * b_rows * d_in * d_out_p
    bytes_accessed = (x_pad.size * 4 * n_n + w_t_p.size * 2
                      + b_p.size * 4 + b_rows * d_out_p * 4)

    return pl.pallas_call(
        _linear_kernel,
        out_shape=jax.ShapeDtypeStruct((b_rows, d_out_p), jnp.float32),
        grid=(n_b, n_n),
        in_specs=[
            pl.BlockSpec((tb, d_in), lambda i, j: (i, 0)),      # x (f32, unpadded D_in)
            pl.BlockSpec((d_in, tn), lambda i, j: (0, j)),      # W (bf16)
            pl.BlockSpec((1, tn), lambda i, j: (0, j)),         # bias (f32)
        ],
        out_specs=pl.BlockSpec((tb, tn), lambda i, j: (i, j)),
        compiler_params=pltpu.CompilerParams(
            dimension_semantics=("parallel", "parallel"),
            vmem_limit_bytes=_VMEM_LIMIT_BYTES),
        cost_estimate=pl.CostEstimate(flops=flops, transcendentals=0,
                                      bytes_accessed=bytes_accessed),
    )(x_pad, w_t_p, b_p)


def linear_mse_partials(x_pad, w_t_p, b_p, t_pad, *, tb, tn, n_valid_rows):
    b_rows, d_in = x_pad.shape
    d_out_p = w_t_p.shape[1]
    n_b, n_n = b_rows // tb, d_out_p // tn

    rows_in_last = None if b_rows == n_valid_rows else n_valid_rows - (n_b - 1) * tb
    kernel = functools.partial(_linear_mse_partial_kernel, tb=tb,
                               rows_in_last_tile=rows_in_last)

    flops = 2 * b_rows * d_in * d_out_p + 3 * b_rows * d_out_p
    bytes_accessed = (x_pad.size * 4 * n_n + w_t_p.size * 2 + b_p.size * 4
                      + t_pad.size * 4 + n_b * 8 * d_out_p * 4)

    return pl.pallas_call(
        kernel,
        out_shape=jax.ShapeDtypeStruct((n_b * 8, d_out_p), jnp.float32),
        grid=(n_b, n_n),
        in_specs=[
            pl.BlockSpec((tb, d_in), lambda i, j: (i, 0)),      # x (f32, unpadded D_in)
            pl.BlockSpec((d_in, tn), lambda i, j: (0, j)),      # W (bf16)
            pl.BlockSpec((1, tn), lambda i, j: (0, j)),         # bias (f32)
            pl.BlockSpec((tb, tn), lambda i, j: (i, j)),        # targets (f32)
        ],
        out_specs=pl.BlockSpec((8, tn), lambda i, j: (i, j)),   # lane-dense partials
        compiler_params=pltpu.CompilerParams(
            dimension_semantics=("parallel", "parallel"),
            vmem_limit_bytes=_VMEM_LIMIT_BYTES),
        cost_estimate=pl.CostEstimate(flops=flops, transcendentals=0,
                                      bytes_accessed=bytes_accessed),
    )(x_pad, w_t_p, b_p, t_pad)


# ---------------------------------------------------------------------------
# Criterion, wrapped model, MultiGPUModelWrap mirror
# ---------------------------------------------------------------------------
class MSELoss:
    """Mirror of torch.nn.MSELoss(reduction='mean')."""

    def __call__(self, predictions, targets):
        return jnp.mean((predictions.astype(jnp.float32)
                         - targets.astype(jnp.float32)) ** 2)


class WrappedLinearModel:
    """Concrete wrapped model: equivalent of torch.nn.Linear(D_in, D_out)."""

    def __init__(self, d_in, d_out, key):
        k_w, k_b = jax.random.split(key)
        bound = 1.0 / (d_in ** 0.5)
        # PyTorch nn.Linear stores W as (out, in); keep the transpose for the kernel.
        w_torch = jax.random.uniform(k_w, (d_out, d_in), jnp.float32, -bound, bound)
        b = jax.random.uniform(k_b, (1, d_out), jnp.float32, -bound, bound)

        self.d_in, self.d_out = d_in, d_out
        # 256-multiple output padding for MXU-shape efficiency on v6e/v7x
        # (2x256x256 MXUs) once the layer is big enough; 128 otherwise.
        self.d_out_p = _round_up(d_out, 256 if d_out > 256 else 128)
        self.tn = _pick_tn(d_in, self.d_out_p)

        # Unpadded f32 copies kept for the reference check / generic paths.
        self.w_t_f32 = jnp.asarray(w_torch.T)                     # [D_in, D_out]
        self.b_f32 = b                                             # [1, D_out]

        # One-time, parameter-side padding / bf16 cast (never per call).
        self.w_t_p = _pad2d(self.w_t_f32, d_in, self.d_out_p,
                            dtype=jnp.bfloat16)                    # [D_in, D_out_p]
        self.b_p = _pad2d(self.b_f32, 1, self.d_out_p)             # [1, D_out_p] f32

    def _prep_x(self, x):
        b_pad, tb = _pick_batch_tiling(x.shape[0], self.d_in, self.tn)
        # x stays f32; D_in is never padded (block last dim == full array dim);
        # only batch rows are padded when B is not a multiple of the tile.
        x_pad = _pad2d(x.astype(jnp.float32), b_pad, self.d_in)
        return x_pad, b_pad, tb

    def __call__(self, x):
        x_pad, _, tb = self._prep_x(x)
        out_pad = linear_forward_padded(x_pad, self.w_t_p, self.b_p,
                                        tb=tb, tn=self.tn)
        return out_pad[:x.shape[0], :self.d_out]


class MultiGPUModelWrap:
    """JAX/Pallas mirror of aitoolbox.torchtrain.model.MultiGPUModelWrap."""

    def __init__(self, model):
        self.model = model
        self.transfer_model_attributes = []

    def forward(self, *input_data, targets=None, criterion=None):
        if criterion is None:
            return self.model(*input_data)

        # Criterion supplied -> compute the loss next to the model forward
        # (the point of MultiGPUModelWrap).  MSE over the wrapped linear model
        # is fused into a single Pallas kernel producing lane-dense per-tile
        # partial sums; the global mean is finished outside the kernel.
        if isinstance(criterion, MSELoss) and isinstance(self.model, WrappedLinearModel):
            (x,) = input_data
            m = self.model
            x_pad, b_pad, tb = m._prep_x(x)
            t_pad = _pad2d(targets.astype(jnp.float32), b_pad, m.d_out_p)
            partials = linear_mse_partials(
                x_pad, m.w_t_p, m.b_p, t_pad,
                tb=tb, tn=m.tn, n_valid_rows=x.shape[0])
            return jnp.sum(partials) * (1.0 / (x.shape[0] * m.d_out))

        # TODO(synk): arbitrary callable criteria are not fused into a single
        # Pallas kernel; fall back to Pallas forward + plain-JAX criterion.
        predictions = self.model(*input_data)
        return criterion(predictions, targets)

    __call__ = forward


# ---------------------------------------------------------------------------
if __name__ == "__main__":
    key = jax.random.PRNGKey(0)
    k_model, k_x, k_t = jax.random.split(key, 3)

    B, D_in, D_out = 8, 32, 32
    x = jax.random.normal(k_x, (B, D_in), jnp.float32)
    targets = jax.random.normal(k_t, (B, D_out), jnp.float32)

    model = WrappedLinearModel(D_in, D_out, k_model)
    wrapped = MultiGPUModelWrap(model)

    # Path 1: no criterion -> predictions (wrapped model forward in Pallas)
    preds = jax.block_until_ready(wrapped(x))

    # Path 2: criterion provided -> fused Pallas linear + MSE partial sums
    loss = jax.block_until_ready(wrapped(x, targets=targets, criterion=MSELoss()))

    # Reference (plain JAX) using the same bf16-rounded operands the MXU sees.
    x_bf = x.astype(jnp.bfloat16).astype(jnp.float32)
    w_bf = model.w_t_f32.astype(jnp.bfloat16).astype(jnp.float32)
    preds_ref = x_bf @ w_bf + model.b_f32
    loss_ref = jnp.mean((preds_ref - targets) ** 2)

    assert preds.shape == (B, D_out)
    assert jnp.allclose(preds, preds_ref, atol=1e-4, rtol=1e-4)
    assert jnp.allclose(loss, loss_ref, atol=1e-4, rtol=1e-4)

    # Sanity vs. the true-f32 reference (loose tolerance for bf16 MXU operands).
    preds_f32 = x @ model.w_t_f32 + model.b_f32
    assert jnp.allclose(preds, preds_f32, atol=5e-2, rtol=5e-2)

    print("KERNEL_OK")
</pallas_src>

<mosaic_0001>
module attributes {stable_mosaic.version = 11 : i64} {
  func.func @_linear_kernel(%arg0: i32, %arg1: i32, %arg2: memref<8x32xf32, #tpu.memory_space<vmem>>, %arg3: memref<32x128xbf16, #tpu.memory_space<vmem>>, %arg4: memref<1x128xf32, #tpu.memory_space<vmem>>, %arg5: memref<8x128xf32, #tpu.memory_space<vmem>>) attributes {dimension_semantics = [#tpu.dimension_semantics<parallel>, #tpu.dimension_semantics<parallel>], iteration_bounds = array<i64: 1, 1>, scalar_prefetch = 0 : i64, scratch_operands = 0 : i64, tpu.core_type = #tpu.core_type<tc>, window_params = [{transform_indices = @transform_0, window_bounds = array<i64: 8, 32>}, {transform_indices = @transform_1, window_bounds = array<i64: 32, 128>}, {transform_indices = @transform_2, window_bounds = array<i64: 1, 128>}, {transform_indices = @transform_3, window_bounds = array<i64: 8, 128>}]} {
    %c0 = arith.constant 0 : index
    %c0_0 = arith.constant 0 : index
    %0 = vector.load %arg2[%c0, %c0_0] : memref<8x32xf32, #tpu.memory_space<vmem>>, vector<8x32xf32>
    %1 = arith.truncf %0 : vector<8x32xf32> to vector<8x32xbf16>
    %c0_1 = arith.constant 0 : index
    %c0_2 = arith.constant 0 : index
    %2 = vector.load %arg3[%c0_1, %c0_2] : memref<32x128xbf16, #tpu.memory_space<vmem>>, vector<32x128xbf16>
    %cst = arith.constant dense<0.000000e+00> : vector<8x128xf32>
    %3 = tpu.matmul %1, %2, %cst {dimension_numbers = #tpu.dot_dimension_numbers<[1], [0], [0], [1], [0, 0, 1, 1], [], []>} : vector<8x32xbf16>, vector<32x128xbf16>, vector<8x128xf32> -> vector<8x128xf32>
    %c0_3 = arith.constant 0 : index
    %c0_4 = arith.constant 0 : index
    %4 = vector.load %arg4[%c0_3, %c0_4] : memref<1x128xf32, #tpu.memory_space<vmem>>, vector<1x128xf32>
    %5 = vector.broadcast %4 : vector<1x128xf32> to vector<8x128xf32>
    %6 = arith.addf %3, %5 : vector<8x128xf32>
    %c0_5 = arith.constant 0 : index
    %c0_6 = arith.constant 0 : index
    %7 = vector.load %arg5[%c0_5, %c0_6] : memref<8x128xf32, #tpu.memory_space<vmem>>, vector<8x128xf32>
    tpu.vector_store %arg5[%c0_5, %c0_6], %6 {strides = array<i32>} : memref<8x128xf32, #tpu.memory_space<vmem>>, vector<8x128xf32>,
    return
  }
  func.func @transform_0(%arg0: i32, %arg1: i32) -> (i32, i32) {
    %c0_i32 = arith.constant 0 : i32
    %c0_i32_0 = arith.constant 0 : i32
    return %arg0, %c0_i32 : i32, i32
  }
  func.func @transform_1(%arg0: i32, %arg1: i32) -> (i32, i32) {
    %c0_i32 = arith.constant 0 : i32
    %c0_i32_0 = arith.constant 0 : i32
    return %c0_i32, %arg1 : i32, i32
  }
  func.func @transform_2(%arg0: i32, %arg1: i32) -> (i32, i32) {
    %c0_i32 = arith.constant 0 : i32
    %c0_i32_0 = arith.constant 0 : i32
    return %c0_i32, %arg1 : i32, i32
  }
  func.func @transform_3(%arg0: i32, %arg1: i32) -> (i32, i32) {
    %c0_i32 = arith.constant 0 : i32
    return %arg0, %arg1 : i32, i32
  }
}

</mosaic_0001>

<llo_original>
// kernel: tpu_custom_call.1
$region0: #{tpu_custom_call.1}
  #allocation0 [shape = 'u32[]', space=smem, size = 0x4, offset = 0x4, fixed_abs, tag = 'smem constant byte address 0x4 - core index']
  #allocation1 [shape = 'u32[144,128]{1,0:T(1,128)}', space=vmem, size = 0x12000, scoped, tag = 'internal scratch']
  %s0 = inlined_call_operand.hbm [shape: f32[8,32], index: 0, kind: input, shape index: {}]
  %s1 = inlined_call_operand.hbm [shape: bf16[32,128], index: 1, kind: input, shape index: {}]
  %s2 = inlined_call_operand.vmem [shape: f32[1,128], index: 2, kind: input, shape index: {}]
  %s3 = inlined_call_operand.hbm [shape: f32[8,128], index: 3, kind: output, shape index: {}]
  %s4 = sld [smem:[#allocation0]]
  $region30: #{tpu_custom_call.1} parent=0
    _
  %s6 = ssub.s32 1, %s4
  %s7 = scalar_select 0, %s6, %s4
  $region1: #{tpu_custom_call.1} parent=0
    #allocation2 [shape = 'u8[4096]{0}', space=vmem, size = 0x1000, scoped, tag = 'input window, operand 0, single buffered']
    #allocation3 [shape = 's32[1]{0}', space=sflag, size = 0x4, scoped, tag = 'scoped memory for tpu_custom_call.1']
    #allocation4 [shape = 's32[1]{0}', space=sflag, size = 0x4, scoped, tag = 'scoped memory for tpu_custom_call.1']
    #allocation5 [shape = 'u8[8192]{0}', space=vmem, size = 0x2000, scoped, tag = 'input window, operand 1, single buffered']
    #allocation6 [shape = 's32[1]{0}', space=sflag, size = 0x4, scoped, tag = 'scoped memory for tpu_custom_call.1']
    #allocation7 [shape = 'u8[4096]{0}', space=vmem, size = 0x1000, scoped, tag = 'output window, operand 0, single buffered']
    %8 = vsyncpa [#allocation3], 0
    %9 = vsyncpa [#allocation6], 0
    %10 = vsyncpa [#allocation4], 0
    // Predicated region
    $region2: #{tpu_custom_call.1} parent=1 // pred_check
      _
    $region3: #{tpu_custom_call.1} parent=1 // pred_check_branch
      %12 = sbr.rel (0) target = $region5
    $region4: #{tpu_custom_call.1} parent=1 // pred_region
      %s14 = ssub.s32 128, 128
      %15 = vsyncadd [#allocation3], %s14
      %s17 = sshll.u32 [#allocation2], 4
      %s18 = int_to_ptr.vmem [resolvable:$true] %s17
      %20 = dma.hbm_to_vmem [thread:$0]  %s0, 128, %s18, [#allocation3]
    $region5: #{tpu_custom_call.1} parent=1 // pred_fallthru
      _
    // Predicated region
    $region6: #{tpu_custom_call.1} parent=1 // pred_check
      _
    $region7: #{tpu_custom_call.1} parent=1 // pred_check_branch
      %22 = sbr.rel (0) target = $region9
    $region8: #{tpu_custom_call.1} parent=1 // pred_region
      %s24 = ssub.s32 256, 256
      %25 = vsyncadd [#allocation6], %s24
      %s26 = sshll.u32 [#allocation5], 4
      %s27 = int_to_ptr.vmem [resolvable:$true] %s26
      %32 = dma.hbm_to_vmem [thread:$0]  %s1, 256, %s27, [#allocation6], 64, 64, 4
    $region9: #{tpu_custom_call.1} parent=1 // pred_fallthru
      _
    // Predicated region
    $region10: #{tpu_custom_call.1} parent=1 // pred_check
      _
    $region11: #{tpu_custom_call.1} parent=1 // pred_check_branch
      %34 = sbr.rel (0) target = $region13
    $region12: #{tpu_custom_call.1} parent=1 // pred_region
      _
    $region13: #{tpu_custom_call.1} parent=1 // pred_fallthru
      _
    // Predicated region
    $region14: #{tpu_custom_call.1} parent=1 // pred_check
      _
    $region15: #{tpu_custom_call.1} parent=1 // pred_check_branch
      %36 = sbr.rel (0) target = $region17
    $region16: #{tpu_custom_call.1} parent=1 // pred_region
      %37 = dma.done [#allocation3], 128
    $region17: #{tpu_custom_call.1} parent=1 // pred_fallthru
      _
    // Predicated region
    $region18: #{tpu_custom_call.1} parent=1 // pred_check
      _
    $region19: #{tpu_custom_call.1} parent=1 // pred_check_branch
      %39 = sbr.rel (0) target = $region21
    $region20: #{tpu_custom_call.1} parent=1 // pred_region
      %40 = dma.done [#allocation6], 256
    $region21: #{tpu_custom_call.1} parent=1 // pred_fallthru
      _
    %v42 = vld [vmem:[#allocation2] sm:$0xff]
    %v43 = vpack.c.bf16 %v42, %v42
    %v44 = vld [vmem:[#allocation5] sm:$0xf]
    %v45 = vld [vmem:[#allocation5 + $0x4] sm:$0xf]
    %v46 = vld [vmem:[#allocation5 + $0x8] sm:$0xf]
    %v47 = vld [vmem:[#allocation5 + $0xc] sm:$0xf]
    %v48 = vld [vmem:[%s2] sm:$0x1]
    %v50 = vlaneseq
    %v51 = vshrl.u32 %v50, 7
    %v52 = vsub.s32 0, %v51
    %v53 = vrot.slane %v48, %v52
    %v59 = vunpack.c.l.b16 %v44
    %v60 = vunpack.c.l.b16 %v45
    %v61 = vunpack.c.l.b16 %v46
    %v62 = vunpack.c.l.b16 %v47
    %v63 = vpack.c.b16 %v60, %v59
    %v64 = vpack.c.b16 %v62, %v61
    %vm67 = vcmask 261120
    %v69 = vsel %vm67, %v43, 0
    %71 = vmatprep.subr.bf16.mxu0 0
    %72 = vmatpush1.bf16.msra.mxu0 %v63
    %73 = vmatprep.subr.bf16.mxu0 0
    %74 = vmatpush1.bf16.msra.mxu0 %v64
    %75 = vmatprep.subr.bf16.mxu0 0
    %76 = vmatpush1.bf16.msra.mxu0 0
    %77 = vmatprep.subr.bf16.mxu0 0
    %78 = vmatpush1.bf16.msra.mxu0 0
    %79 = vmatprep.subr.bf16.mxu0 0
    %80 = vmatpush1.bf16.msra.mxu0 0
    %81 = vmatprep.subr.bf16.mxu0 0
    %82 = vmatpush1.bf16.msra.mxu0 0
    %83 = vmatprep.subr.bf16.mxu0 0
    %84 = vmatpush1.bf16.msra.mxu0 0
    %85 = vmatprep.subr.bf16.mxu0 0
    %86 = vmatpush1.bf16.msra.mxu0 0
    %87 = vmatprep.subr.bf16.mxu0 0
    %88 = vmatpush1.bf16.msra.mxu0 0
    %89 = vmatprep.subr.bf16.mxu0 0
    %90 = vmatpush1.bf16.msra.mxu0 0
    %91 = vmatprep.subr.bf16.mxu0 0
    %92 = vmatpush1.bf16.msra.mxu0 0
    %93 = vmatprep.subr.bf16.mxu0 0
    %94 = vmatpush1.bf16.msra.mxu0 0
    %95 = vmatprep.subr.bf16.mxu0 0
    %96 = vmatpush1.bf16.msra.mxu0 0
    %97 = vmatprep.subr.bf16.mxu0 0
    %98 = vmatpush1.bf16.msra.mxu0 0
    %99 = vmatprep.subr.bf16.mxu0 0
    %100 = vmatpush1.bf16.msra.mxu0 0
    %101 = vmatprep.subr.bf16.mxu0 0
    %102 = vmatpush1.bf16.msra.mxu0 0
    %103 = vmatprep.mubr.bf16.mxu0 0
    %104 = vmatmul.mubr.bf16.gmra.mrb[0].mxu0 %v69
    %v105 = vpop.f32.mrb[0].mxu0
    %v106 = vadd.f32 %v53, %v105
    %v107 = vpop.f32.mrb[0].mxu0
    %v108 = vpop.f32.mrb[0].mxu0
    %v109 = vpop.f32.mrb[0].mxu0
    %110 = vdwg.mxu0
    %111 = vst [vmem:[#allocation7] sm:$0xff] %v106
    // Predicated region
    $region22: #{tpu_custom_call.1} parent=1 // pred_check
      _
    $region23: #{tpu_custom_call.1} parent=1 // pred_check_branch
      %113 = sbr.rel (0) target = $region25
    $region24: #{tpu_custom_call.1} parent=1 // pred_region
      %s115 = ssub.s32 128, 128
      %116 = vsyncadd [#allocation4], %s115
      %s118 = sshll.u32 [#allocation7], 4
      %s119 = int_to_ptr.vmem [resolvable:$true] %s118
      %121 = dma.vmem_to_hbm [thread:$0]  %s119, 128, %s3, [#allocation4]
    $region25: #{tpu_custom_call.1} parent=1 // pred_fallthru
      _
    // Predicated region
    $region26: #{tpu_custom_call.1} parent=1 // pred_check
      _
    $region27: #{tpu_custom_call.1} parent=1 // pred_check_branch
      %123 = sbr.rel (0) target = $region29
    $region28: #{tpu_custom_call.1} parent=1 // pred_region
      %124 = dma.done [#allocation4], 128
    $region29: #{tpu_custom_call.1} parent=1 // pred_fallthru
      _
    %125 = vsyncpa [#allocation3], 1
    %126 = vsyncpa [#allocation6], 1
    %127 = vsyncpa [#allocation4], 1

</llo_original>
